<compile_context>
chip_gen: v7x
topology: tpu7x:2x2x1
jax: 0.10.0
libtpu: 0.0.40
codegen_flags: <defaults>
</compile_context>

<pallas_src>
from functools import partial
import math

import jax
import jax.numpy as jnp
from jax.experimental import pallas as pl
from jax.experimental.pallas import tpu as pltpu


def _round_up(x, m):
    return -(-x // m) * m


def dw_conv_bn_relu_kernel(x_ref, w_ref, b_ref, o_ref, *,
                           kh_size, kw_size, stride, channels, row_tile,
                           out_wc_pad, wc_pad):
    """One grid step computes `row_tile` output rows of one batch element.

    x_ref : (s, s, Hph, WCpad)    phase-split, zero-padded input (batch
                                  squeezed); WCpad is a multiple of 128
    w_ref : (KH*KW, out_wc_pad)   BN-scale-folded depthwise weights, pre-tiled
                                  to the flattened lane layout (zero lane pad)
    b_ref : (1, out_wc_pad)       folded BN bias, tiled likewise
    o_ref : (row_tile, out_wc_pad) output row tile (lane-dense, 128-multiple)
    """
    t = pl.program_id(1)
    row0 = pl.multiple_of(t * row_tile, row_tile)

    # Accumulator initialised from the folded BN bias: saves a full VALU pass
    # over the tile compared to zeros + a separate bias add at the end.
    acc = jnp.broadcast_to(b_ref[...], (row_tile, out_wc_pad)).astype(jnp.float32)

    n_pw = min(stride, kw_size)
    for kh in range(kh_size):
        ph, dh = kh % stride, kh // stride
        # One full-width, lane-aligned row slab per (kh, w-phase); cast to the
        # f32 accumulation dtype once per slab (not once per tap).
        slabs = [
            x_ref[ph, pw, pl.ds(row0 + dh, row_tile), :].astype(jnp.float32)
            for pw in range(n_pw)
        ]
        for kw in range(kw_size):
            pw, dw = kw % stride, kw // stride
            slab = slabs[pw]
            if dw:
                # Bring lane column dw*C to lane 0: static XLU lane rotation
                # (same semantics as jnp.roll with shift = -dw*C).
                slab = pltpu.roll(slab, shift=wc_pad - dw * channels, axis=1)
            tap = slab[:, :out_wc_pad]            # lane-aligned (start 0, x128)
            acc = acc + tap * w_ref[kh * kw_size + kw, :]

    o_ref[...] = jnp.maximum(acc, 0.0).astype(o_ref.dtype)


def _pick_row_tile(out_h, out_wc_pad, *, max_row_tile=256,
                   target_bytes=512 * 1024):
    """Multiple-of-8 output-row tile sized so each grid step writes a few
    hundred KB (amortises the ~0.35us/step overhead) without blowing VMEM."""
    out_h_pad8 = _round_up(out_h, 8)
    rows = max(8, (target_bytes // (out_wc_pad * 4)) // 8 * 8)
    rows = min(rows, _round_up(max_row_tile, 8), out_h_pad8)
    return rows


def _vmem_limit_bytes():
    # ~3/4 of the physical VMEM of the generation we are actually running on
    # (v5e/v6e: 128 MiB -> capped at 100 MiB; v7x: 64 MiB -> 48 MiB).
    try:
        cap = getattr(pltpu.get_tpu_info(), "vmem_capacity_bytes", None)
        if cap:
            return int(min(100 * 1024 * 1024, (cap * 3) // 4))
    except Exception:
        pass
    return 48 * 1024 * 1024


def depthwise_conv_bn_relu(x_nchw, weight_oihw, bn_gamma, bn_beta, bn_mean,
                           bn_var, *, stride=1, padding=1, eps=1e-5,
                           max_row_tile=256):
    """weight_oihw has PyTorch depthwise shape (C, 1, KH, KW)."""
    N, C, H, W = x_nchw.shape
    KH, KW = weight_oihw.shape[-2:]
    s = stride
    out_h = (H + 2 * padding - KH) // s + 1
    out_w = (W + 2 * padding - KW) // s + 1
    out_wc = out_w * C
    out_wc_pad = _round_up(out_wc, 128)

    # Row tiling of the output; pad out_h so it divides into full tiles.
    row_tile = _pick_row_tile(out_h, out_wc_pad, max_row_tile=max_row_tile)
    out_h_pad = _round_up(out_h, row_tile)
    n_row_tiles = out_h_pad // row_tile

    # Padded geometry of the phase-split input:
    #  - phase height must cover every row-tile read incl. the kh halo,
    #  - width is padded so the flattened (W-phase * C) lane axis is a multiple
    #    of 128 (unmasked vld + 128-multiple roll axis).
    h_ph = max(_round_up(H + 2 * padding, s) // s, out_h_pad + (KH - 1) // s)
    lane_quant = 128 // math.gcd(C, 128)
    w_ph = _round_up(_round_up(W + 2 * padding, s) // s, lane_quant)
    wc_pad = w_ph * C
    hp_tot, wp_tot = h_ph * s, w_ph * s

    # VMEM refs have no runtime bounds check: guard the padding arithmetic.
    assert wc_pad % 128 == 0 and out_wc_pad % 128 == 0 and wc_pad >= out_wc_pad
    assert h_ph >= out_h_pad + (KH - 1) // s
    assert (out_h - 1) * s + KH <= hp_tot and (out_w - 1) * s + KW <= wp_tot
    assert hp_tot >= H + 2 * padding and wp_tot >= W + 2 * padding

    # ---- wrapper-side layout glue (plain JAX) ------------------------------
    # NCHW -> NHWC; a SINGLE jnp.pad covers the conv zero padding plus the
    # phase/lane alignment padding; then split into stride^2 phases and flatten
    # (W-phase, C) into one lane-dense axis (identity permutation for s=1).
    # TODO(synk): in an NHWC-end-to-end model these transposes disappear; they
    # are kept only to match the PyTorch NCHW interface.
    x = jnp.transpose(x_nchw, (0, 2, 3, 1))
    x = jnp.pad(x, ((0, 0),
                    (padding, hp_tot - H - padding),
                    (padding, wp_tot - W - padding),
                    (0, 0)))
    x5 = x.reshape(N, h_ph, s, w_ph, s, C)
    x5 = jnp.transpose(x5, (0, 2, 4, 1, 3, 5))        # (N, s, s, Hph, Wph, C)
    x5 = x5.reshape(N, s, s, h_ph, wc_pad)

    # Fold BN (eval mode) into the depthwise weights / bias; tile to the
    # flattened, 128-padded lane layout (tiny (KH*KW, out_wc_pad) arrays).
    inv_std = 1.0 / jnp.sqrt(bn_var.astype(jnp.float32) + eps)
    scale = bn_gamma.astype(jnp.float32) * inv_std                      # (C,)
    bias = bn_beta.astype(jnp.float32) - bn_mean.astype(jnp.float32) * scale
    w = jnp.transpose(weight_oihw.reshape(C, KH, KW), (1, 2, 0))        # (KH,KW,C)
    w_scaled = (w.astype(jnp.float32) * scale).reshape(KH * KW, C)
    w_flat = jnp.pad(jnp.tile(w_scaled, (1, out_w)),
                     ((0, 0), (0, out_wc_pad - out_wc)))
    b_flat = jnp.pad(jnp.tile(bias.reshape(1, C), (1, out_w)),
                     ((0, 0), (0, out_wc_pad - out_wc)))

    kernel = partial(dw_conv_bn_relu_kernel, kh_size=KH, kw_size=KW,
                     stride=s, channels=C, row_tile=row_tile,
                     out_wc_pad=out_wc_pad, wc_pad=wc_pad)

    out_flat = pl.pallas_call(
        kernel,
        out_shape=jax.ShapeDtypeStruct((N, out_h_pad, out_wc_pad),
                                       x_nchw.dtype),
        grid_spec=pltpu.PrefetchScalarGridSpec(
            num_scalar_prefetch=0,
            grid=(N, n_row_tiles),
            in_specs=[
                # Full (phase-split) image per batch element; constant along
                # the row-tile axis so the pipeline keeps one copy in VMEM.
                # TODO(synk): row-tile the input (with a (KH-1)-row halo via
                # pl.ANY + manual DMA) for feature maps too large for v7x VMEM.
                pl.BlockSpec((None, s, s, h_ph, wc_pad),
                             lambda n, t: (n, 0, 0, 0, 0)),
                pl.BlockSpec((KH * KW, out_wc_pad), lambda n, t: (0, 0)),
                pl.BlockSpec((1, out_wc_pad), lambda n, t: (0, 0)),
            ],
            out_specs=pl.BlockSpec((None, row_tile, out_wc_pad),
                                   lambda n, t: (n, t, 0)),
        ),
        compiler_params=pltpu.CompilerParams(
            dimension_semantics=("parallel", "parallel"),
            vmem_limit_bytes=_vmem_limit_bytes(),
        ),
    )(x5, w_flat, b_flat)

    # Drop row/lane padding, (N, Ho, Wo*C) -> (N, Ho, Wo, C) -> PyTorch NCHW.
    out = out_flat[:, :out_h, :out_wc].reshape(N, out_h, out_w, C)
    return jnp.transpose(out, (0, 3, 1, 2))


def reference(x_nchw, weight_oihw, gamma, beta, mean, var, stride, padding, eps):
    out = jax.lax.conv_general_dilated(
        x_nchw, weight_oihw,
        window_strides=(stride, stride),
        padding=[(padding, padding), (padding, padding)],
        dimension_numbers=("NCHW", "OIHW", "NCHW"),
        feature_group_count=x_nchw.shape[1],
        precision=jax.lax.Precision.HIGHEST)
    s = (gamma / jnp.sqrt(var + eps)).reshape(1, -1, 1, 1)
    b = (beta - mean * gamma / jnp.sqrt(var + eps)).reshape(1, -1, 1, 1)
    return jnp.maximum(out * s + b, 0.0)


if __name__ == "__main__":
    eps = 1e-5

    def run_case(key, planes, k, stride, padding, N, H, W, **kwargs):
        kx, kwt, kg, kb, km, kv = jax.random.split(key, 6)
        x = jax.random.normal(kx, (N, planes, H, W), dtype=jnp.float32)
        # depthwise conv weight: (out_ch=planes, in_ch/groups=1, KH, KW)
        weight = 0.1 * jax.random.normal(kwt, (planes, 1, k, k), jnp.float32)
        # non-trivial (deterministic) BN parameters to exercise the fold
        gamma = 1.0 + 0.1 * jax.random.normal(kg, (planes,), jnp.float32)
        beta = 0.1 * jax.random.normal(kb, (planes,), jnp.float32)
        mean = 0.1 * jax.random.normal(km, (planes,), jnp.float32)
        var = 1.0 + 0.5 * jax.random.uniform(kv, (planes,), jnp.float32)

        out = depthwise_conv_bn_relu(x, weight, gamma, beta, mean, var,
                                     stride=stride, padding=padding, eps=eps,
                                     **kwargs)
        out = jax.block_until_ready(out)

        ref = reference(x, weight, gamma, beta, mean, var, stride, padding, eps)
        assert out.shape == ref.shape, (out.shape, ref.shape)
        assert jnp.allclose(out, ref, atol=1e-5, rtol=1e-5), \
            f"mismatch vs reference (stride={stride}, H={H}, W={W})"

    # primary config: stride-1 depthwise block
    run_case(jax.random.PRNGKey(0), planes=4, k=3, stride=1, padding=1,
             N=2, H=16, W=16)
    # strided depthwise layer (space-to-depth phase-split path)
    run_case(jax.random.PRNGKey(1), planes=4, k=3, stride=2, padding=1,
             N=2, H=16, W=16)
    # non-multiple-of-8 out_h: padded output rows + multi row-tile grid path
    run_case(jax.random.PRNGKey(2), planes=8, k=3, stride=1, padding=1,
             N=1, H=14, W=14, max_row_tile=8)

    print("KERNEL_OK")
</pallas_src>

<mosaic_0001>
module attributes {stable_mosaic.version = 11 : i64} {
  func.func @dw_conv_bn_relu_kernel(%arg0: i32, %arg1: i32, %arg2: memref<1x1x1x18x128xf32, #tpu.memory_space<vmem>>, %arg3: memref<9x128xf32, #tpu.memory_space<vmem>>, %arg4: memref<1x128xf32, #tpu.memory_space<vmem>>, %arg5: memref<1x16x128xf32, #tpu.memory_space<vmem>>) attributes {dimension_semantics = [#tpu.dimension_semantics<parallel>, #tpu.dimension_semantics<parallel>], iteration_bounds = array<i64: 2, 1>, scalar_prefetch = 0 : i64, scratch_operands = 0 : i64, tpu.core_type = #tpu.core_type<tc>, window_params = [{transform_indices = @transform_0, window_bounds = array<i64: 1, 1, 1, 18, 128>}, {pipeline_mode = #tpu.pipeline_mode<synchronous>, transform_indices = @transform_1, window_bounds = array<i64: 9, 128>}, {pipeline_mode = #tpu.pipeline_mode<synchronous>, transform_indices = @transform_2, window_bounds = array<i64: 1, 128>}, {transform_indices = @transform_3, window_bounds = array<i64: 1, 16, 128>}]} {
    %c16_i32 = arith.constant 16 : i32
    %0 = arith.muli %arg1, %c16_i32 : i32
    %1 = tpu.assume_multiple %0, 16 : i32
    %c0 = arith.constant 0 : index
    %c0_0 = arith.constant 0 : index
    %2 = vector.load %arg4[%c0, %c0_0] : memref<1x128xf32, #tpu.memory_space<vmem>>, vector<1x128xf32>
    %3 = vector.shape_cast %2 : vector<1x128xf32> to vector<1x128xf32>
    %4 = vector.broadcast %3 : vector<1x128xf32> to vector<16x128xf32>
    %c0_i32 = arith.constant 0 : i32
    %5 = arith.addi %1, %c0_i32 : i32
    %c0_1 = arith.constant 0 : index
    %c0_2 = arith.constant 0 : index
    %c0_3 = arith.constant 0 : index
    %6 = arith.index_cast %5 : i32 to index
    %c0_4 = arith.constant 0 : index
    %7 = vector.load %arg2[%c0_1, %c0_2, %c0_3, %6, %c0_4] : memref<1x1x1x18x128xf32, #tpu.memory_space<vmem>>, vector<1x1x1x16x128xf32>
    %8 = vector.shape_cast %7 : vector<1x1x1x16x128xf32> to vector<16x128xf32>
    %c0_5 = arith.constant 0 : index
    %c0_6 = arith.constant 0 : index
    %9 = vector.load %arg3[%c0_5, %c0_6] : memref<9x128xf32, #tpu.memory_space<vmem>>, vector<1x128xf32>
    %10 = vector.shape_cast %9 : vector<1x128xf32> to vector<128xf32>
    %11 = vector.shape_cast %10 : vector<128xf32> to vector<1x128xf32>
    %12 = vector.broadcast %11 : vector<1x128xf32> to vector<16x128xf32>
    %13 = arith.mulf %8, %12 : vector<16x128xf32>
    %14 = arith.addf %4, %13 : vector<16x128xf32>
    %c124_i32 = arith.constant 124 : i32
    %15 = tpu.dynamic_rotate %8 by %c124_i32 dim 1 : vector<16x128xf32>, i32 -> vector<16x128xf32>
    %c1 = arith.constant 1 : index
    %c0_7 = arith.constant 0 : index
    %16 = vector.load %arg3[%c1, %c0_7] : memref<9x128xf32, #tpu.memory_space<vmem>>, vector<1x128xf32>
    %17 = vector.shape_cast %16 : vector<1x128xf32> to vector<128xf32>
    %18 = vector.shape_cast %17 : vector<128xf32> to vector<1x128xf32>
    %19 = vector.broadcast %18 : vector<1x128xf32> to vector<16x128xf32>
    %20 = arith.mulf %15, %19 : vector<16x128xf32>
    %21 = arith.addf %14, %20 : vector<16x128xf32>
    %c120_i32 = arith.constant 120 : i32
    %22 = tpu.dynamic_rotate %8 by %c120_i32 dim 1 : vector<16x128xf32>, i32 -> vector<16x128xf32>
    %c2 = arith.constant 2 : index
    %c0_8 = arith.constant 0 : index
    %23 = vector.load %arg3[%c2, %c0_8] : memref<9x128xf32, #tpu.memory_space<vmem>>, vector<1x128xf32>
    %24 = vector.shape_cast %23 : vector<1x128xf32> to vector<128xf32>
    %25 = vector.shape_cast %24 : vector<128xf32> to vector<1x128xf32>
    %26 = vector.broadcast %25 : vector<1x128xf32> to vector<16x128xf32>
    %27 = arith.mulf %22, %26 : vector<16x128xf32>
    %28 = arith.addf %21, %27 : vector<16x128xf32>
    %c1_i32 = arith.constant 1 : i32
    %29 = arith.addi %1, %c1_i32 : i32
    %c0_9 = arith.constant 0 : index
    %c0_10 = arith.constant 0 : index
    %c0_11 = arith.constant 0 : index
    %30 = arith.index_cast %29 : i32 to index
    %c0_12 = arith.constant 0 : index
    %31 = vector.load %arg2[%c0_9, %c0_10, %c0_11, %30, %c0_12] : memref<1x1x1x18x128xf32, #tpu.memory_space<vmem>>, vector<1x1x1x16x128xf32>
    %32 = vector.shape_cast %31 : vector<1x1x1x16x128xf32> to vector<16x128xf32>
    %c3 = arith.constant 3 : index
    %c0_13 = arith.constant 0 : index
    %33 = vector.load %arg3[%c3, %c0_13] : memref<9x128xf32, #tpu.memory_space<vmem>>, vector<1x128xf32>
    %34 = vector.shape_cast %33 : vector<1x128xf32> to vector<128xf32>
    %35 = vector.shape_cast %34 : vector<128xf32> to vector<1x128xf32>
    %36 = vector.broadcast %35 : vector<1x128xf32> to vector<16x128xf32>
    %37 = arith.mulf %32, %36 : vector<16x128xf32>
    %38 = arith.addf %28, %37 : vector<16x128xf32>
    %c124_i32_14 = arith.constant 124 : i32
    %39 = tpu.dynamic_rotate %32 by %c124_i32_14 dim 1 : vector<16x128xf32>, i32 -> vector<16x128xf32>
    %c4 = arith.constant 4 : index
    %c0_15 = arith.constant 0 : index
    %40 = vector.load %arg3[%c4, %c0_15] : memref<9x128xf32, #tpu.memory_space<vmem>>, vector<1x128xf32>
    %41 = vector.shape_cast %40 : vector<1x128xf32> to vector<128xf32>
    %42 = vector.shape_cast %41 : vector<128xf32> to vector<1x128xf32>
    %43 = vector.broadcast %42 : vector<1x128xf32> to vector<16x128xf32>
    %44 = arith.mulf %39, %43 : vector<16x128xf32>
    %45 = arith.addf %38, %44 : vector<16x128xf32>
    %c120_i32_16 = arith.constant 120 : i32
    %46 = tpu.dynamic_rotate %32 by %c120_i32_16 dim 1 : vector<16x128xf32>, i32 -> vector<16x128xf32>
    %c5 = arith.constant 5 : index
    %c0_17 = arith.constant 0 : index
    %47 = vector.load %arg3[%c5, %c0_17] : memref<9x128xf32, #tpu.memory_space<vmem>>, vector<1x128xf32>
    %48 = vector.shape_cast %47 : vector<1x128xf32> to vector<128xf32>
    %49 = vector.shape_cast %48 : vector<128xf32> to vector<1x128xf32>
    %50 = vector.broadcast %49 : vector<1x128xf32> to vector<16x128xf32>
    %51 = arith.mulf %46, %50 : vector<16x128xf32>
    %52 = arith.addf %45, %51 : vector<16x128xf32>
    %c2_i32 = arith.constant 2 : i32
    %53 = arith.addi %1, %c2_i32 : i32
    %c0_18 = arith.constant 0 : index
    %c0_19 = arith.constant 0 : index
    %c0_20 = arith.constant 0 : index
    %54 = arith.index_cast %53 : i32 to index
    %c0_21 = arith.constant 0 : index
    %55 = vector.load %arg2[%c0_18, %c0_19, %c0_20, %54, %c0_21] : memref<1x1x1x18x128xf32, #tpu.memory_space<vmem>>, vector<1x1x1x16x128xf32>
    %56 = vector.shape_cast %55 : vector<1x1x1x16x128xf32> to vector<16x128xf32>
    %c6 = arith.constant 6 : index
    %c0_22 = arith.constant 0 : index
    %57 = vector.load %arg3[%c6, %c0_22] : memref<9x128xf32, #tpu.memory_space<vmem>>, vector<1x128xf32>
    %58 = vector.shape_cast %57 : vector<1x128xf32> to vector<128xf32>
    %59 = vector.shape_cast %58 : vector<128xf32> to vector<1x128xf32>
    %60 = vector.broadcast %59 : vector<1x128xf32> to vector<16x128xf32>
    %61 = arith.mulf %56, %60 : vector<16x128xf32>
    %62 = arith.addf %52, %61 : vector<16x128xf32>
    %c124_i32_23 = arith.constant 124 : i32
    %63 = tpu.dynamic_rotate %56 by %c124_i32_23 dim 1 : vector<16x128xf32>, i32 -> vector<16x128xf32>
    %c7 = arith.constant 7 : index
    %c0_24 = arith.constant 0 : index
    %64 = vector.load %arg3[%c7, %c0_24] : memref<9x128xf32, #tpu.memory_space<vmem>>, vector<1x128xf32>
    %65 = vector.shape_cast %64 : vector<1x128xf32> to vector<128xf32>
    %66 = vector.shape_cast %65 : vector<128xf32> to vector<1x128xf32>
    %67 = vector.broadcast %66 : vector<1x128xf32> to vector<16x128xf32>
    %68 = arith.mulf %63, %67 : vector<16x128xf32>
    %69 = arith.addf %62, %68 : vector<16x128xf32>
    %c120_i32_25 = arith.constant 120 : i32
    %70 = tpu.dynamic_rotate %56 by %c120_i32_25 dim 1 : vector<16x128xf32>, i32 -> vector<16x128xf32>
    %c8 = arith.constant 8 : index
    %c0_26 = arith.constant 0 : index
    %71 = vector.load %arg3[%c8, %c0_26] : memref<9x128xf32, #tpu.memory_space<vmem>>, vector<1x128xf32>
    %72 = vector.shape_cast %71 : vector<1x128xf32> to vector<128xf32>
    %73 = vector.shape_cast %72 : vector<128xf32> to vector<1x128xf32>
    %74 = vector.broadcast %73 : vector<1x128xf32> to vector<16x128xf32>
    %75 = arith.mulf %70, %74 : vector<16x128xf32>
    %76 = arith.addf %69, %75 : vector<16x128xf32>
    %cst = arith.constant 0.000000e+00 : f32
    %77 = vector.broadcast %cst : f32 to vector<16x128xf32>
    %78 = arith.maximumf %76, %77 : vector<16x128xf32>
    %c0_27 = arith.constant 0 : index
    %c0_28 = arith.constant 0 : index
    %c0_29 = arith.constant 0 : index
    %79 = vector.load %arg5[%c0_27, %c0_28, %c0_29] : memref<1x16x128xf32, #tpu.memory_space<vmem>>, vector<1x16x128xf32>
    %80 = vector.shape_cast %79 : vector<1x16x128xf32> to vector<16x128xf32>
    %81 = vector.shape_cast %78 : vector<16x128xf32> to vector<1x16x128xf32>
    tpu.vector_store %arg5[%c0_27, %c0_28, %c0_29], %81 {strides = array<i32>} : memref<1x16x128xf32, #tpu.memory_space<vmem>>, vector<1x16x128xf32>,
    return
  }
  func.func @transform_0(%arg0: i32, %arg1: i32) -> (i32, i32, i32, i32, i32) {
    %c0_i32 = arith.constant 0 : i32
    %c0_i32_0 = arith.constant 0 : i32
    %c0_i32_1 = arith.constant 0 : i32
    %c0_i32_2 = arith.constant 0 : i32
    %c0_i32_3 = arith.constant 0 : i32
    return %arg0, %c0_i32, %c0_i32_0, %c0_i32_1, %c0_i32_2 : i32, i32, i32, i32, i32
  }
  func.func @transform_1(%arg0: i32, %arg1: i32) -> (i32, i32) {
    %c0_i32 = arith.constant 0 : i32
    %c0_i32_0 = arith.constant 0 : i32
    %c0_i32_1 = arith.constant 0 : i32
    return %c0_i32, %c0_i32_0 : i32, i32
  }
  func.func @transform_2(%arg0: i32, %arg1: i32) -> (i32, i32) {
    %c0_i32 = arith.constant 0 : i32
    %c0_i32_0 = arith.constant 0 : i32
    %c0_i32_1 = arith.constant 0 : i32
    return %c0_i32, %c0_i32_0 : i32, i32
  }
  func.func @transform_3(%arg0: i32, %arg1: i32) -> (i32, i32, i32) {
    %c0_i32 = arith.constant 0 : i32
    %c0_i32_0 = arith.constant 0 : i32
    return %arg0, %arg1, %c0_i32 : i32, i32, i32
  }
}

</mosaic_0001>

<llo_original>
// kernel: tpu_custom_call.1
$region0: #{tpu_custom_call.1}
  #allocation0 [shape = 'u32[]', space=smem, size = 0x4, offset = 0x4, fixed_abs, tag = 'smem constant byte address 0x4 - core index']
  #allocation1 [shape = 'u32[144,128]{1,0:T(1,128)}', space=vmem, size = 0x12000, scoped, tag = 'internal scratch']
  %s0 = inlined_call_operand.vmem [shape: f32[2,1,1,18,128], index: 0, kind: input, shape index: {}]
  %s1 = inlined_call_operand.vmem [shape: f32[9,128], index: 1, kind: input, shape index: {}]
  %s2 = inlined_call_operand.vmem [shape: f32[1,128], index: 2, kind: input, shape index: {}]
  %s3 = inlined_call_operand.hbm [shape: f32[2,16,128], index: 3, kind: output, shape index: {}]
  %s4 = sld [smem:[#allocation0]]
  $region45: #{tpu_custom_call.1} parent=0
    _
  %s6 = ssub.s32 1, %s4
  %s7 = scalar_select 0, %s6, %s4
  $region1: #{tpu_custom_call.1} parent=0
    #allocation2 [shape = 'u8[16384]{0}', space=vmem, size = 0x4000, scoped, tag = 'output window, operand 0']
    #allocation3 [shape = 's32[2]{0}', space=sflag, size = 0x8, scoped, tag = 'scoped memory for tpu_custom_call.1']
    %8 = vsyncpa [#allocation3], 0
    %s9 = scalar_lea.sflag [#allocation3], 1
    %10 = vsyncpa %s9, 0
    loop: start=0, step=1, limit=4
    $region2: #{tpu_custom_call.1} parent=1 // loop_pre_header
      _
    $region3: #{tpu_custom_call.1} parent=1 // loop_header
      %s12 = sphi 0, %s16
      %p13 = scmp.ge.s32.totalorder %s12, 4
      %s19 = sphi 0, %s31
      %s20 = sphi 0, %s27
      %s21 = sphi 0, %s19
      %s22 = sphi 0, %s20
      %s23 = sphi 0, %s21
      %s24 = sphi 0, %s22
      %s34 = sphi 0, %s36
      %s37 = sphi 0, %s34
      %s38 = sphi 0, %s37
      %s54 = sphi 0, %s38
      %s58 = sphi 0, %s58
      %s60 = sphi 0, %s58
      %s61 = sphi 0, %s60
      %s75 = sphi 0, %s61
      %s79 = sphi 0, %s79
      %s81 = sphi 0, %s79
      %s82 = sphi 0, %s81
      %s96 = sphi 0, %s82
      %s104 = sphi 0, %s106
      %s107 = sphi 0, %s104
      %s108 = sphi 0, %s107
      %s124 = sphi 0, %s108
    $region4: #{tpu_custom_call.1} parent=1 // loop_header_branch
      %15 = sbr.rel (%p13) target = $region8
    $region5: #{tpu_custom_call.1} parent=1 // loop_body
      %s17 = ssub.s32 %s12, 1
      %s18 = ssub.s32 %s12, 2
      %s25 = sadd.s32 1, %s20
      %p26 = scmp.ge.s32.totalorder %s25, 1
      %s27 = scalar_select %p26, 0, %s25
      %s28 = sadd.s32 1, %s19
      %s29 = scalar_select %p26, %s28, %s19
      %p30 = scmp.ge.s32.totalorder %s29, 2
      %s31 = scalar_select %p30, 0, %s29
      %s32 = ssub.s32 %s19, %s31
      %p33 = scmp.eq.s32.totalorder %s32, 0
      %s35 = sadd.s32 %s34, 1
      %s36 = scalar_select %p33, %s34, %s35
      %p39 = pneg %p33
      %p40 = scmp.eq.s32.totalorder %s12, 1
      %p41 = por %p39, %p40
      %p42 = scmp.ne.s32.totalorder %s34, %s37
      %p43 = scmp.eq.s32.totalorder %s12, 0
      %p44 = por %p42, %p43
      %p45 = scmp.ne.s32.totalorder %s34, %s37
      %p46 = scmp.eq.s32.totalorder %s17, 1
      %p47 = por %p45, %p46
      %p48 = scmp.ne.s32.totalorder %s37, %s38
      %p49 = scmp.eq.s32.totalorder %s17, 0
      %p50 = por %p48, %p49
      %p51 = scmp.ne.s32.totalorder %s37, %s38
      %p52 = scmp.eq.s32.totalorder %s18, 1
      %p53 = por %p51, %p52
      %p55 = scmp.ne.s32.totalorder %s38, %s54
      %p56 = scmp.eq.s32.totalorder %s18, 0
      %p57 = por %p55, %p56
      %s59 = sadd.s32 %s58, 1
      %p62 = scmp.eq.s32.totalorder %s12, 1
      %p63 = scmp.ne.s32.totalorder %s58, %s60
      %p64 = scmp.eq.s32.totalorder %s12, 0
      %p65 = por %p63, %p64
      %p66 = scmp.ne.s32.totalorder %s58, %s60
      %p67 = scmp.eq.s32.totalorder %s17, 1
      %p68 = por %p66, %p67
      %p69 = scmp.ne.s32.totalorder %s60, %s61
      %p70 = scmp.eq.s32.totalorder %s17, 0
      %p71 = por %p69, %p70
      %p72 = scmp.ne.s32.totalorder %s60, %s61
      %p73 = scmp.eq.s32.totalorder %s18, 1
      %p74 = por %p72, %p73
      %p76 = scmp.ne.s32.totalorder %s61, %s75
      %p77 = scmp.eq.s32.totalorder %s18, 0
      %p78 = por %p76, %p77
      %s80 = sadd.s32 %s79, 1
      %p83 = scmp.eq.s32.totalorder %s12, 1
      %p84 = scmp.ne.s32.totalorder %s79, %s81
      %p85 = scmp.eq.s32.totalorder %s12, 0
      %p86 = por %p84, %p85
      %p87 = scmp.ne.s32.totalorder %s79, %s81
      %p88 = scmp.eq.s32.totalorder %s17, 1
      %p89 = por %p87, %p88
      %p90 = scmp.ne.s32.totalorder %s81, %s82
      %p91 = scmp.eq.s32.totalorder %s17, 0
      %p92 = por %p90, %p91
      %p93 = scmp.ne.s32.totalorder %s81, %s82
      %p94 = scmp.eq.s32.totalorder %s18, 1
      %p95 = por %p93, %p94
      %p97 = scmp.ne.s32.totalorder %s82, %s96
      %p98 = scmp.eq.s32.totalorder %s18, 0
      %p99 = por %p97, %p98
      %s100 = ssub.s32 %s19, %s31
      %s101 = ssub.s32 %s20, %s27
      %s102 = sor.u32 %s100, %s101
      %p103 = scmp.eq.s32.totalorder %s102, 0
      %s105 = sadd.s32 %s104, 1
      %s106 = scalar_select %p103, %s104, %s105
      %p109 = pneg %p103
      %p110 = scmp.eq.s32.totalorder %s12, 1
      %p111 = por %p109, %p110
      %p112 = scmp.ne.s32.totalorder %s104, %s107
      %p113 = scmp.eq.s32.totalorder %s12, 0
      %p114 = por %p112, %p113
      %p115 = scmp.ne.s32.totalorder %s104, %s107
      %p116 = scmp.eq.s32.totalorder %s17, 1
      %p117 = por %p115, %p116
      %p118 = scmp.ne.s32.totalorder %s107, %s108
      %p119 = scmp.eq.s32.totalorder %s17, 0
      %p120 = por %p118, %p119
      %p121 = scmp.ne.s32.totalorder %s107, %s108
      %p122 = scmp.eq.s32.totalorder %s18, 1
      %p123 = por %p121, %p122
      %p125 = scmp.ne.s32.totalorder %s108, %s124
      %p126 = scmp.eq.s32.totalorder %s18, 0
      %p127 = por %p125, %p126
      %p128 = scmp.le.s32.totalorder 1, %s12
      %p129 = scmp.lt.s32.totalorder %s12, 3
      %p130 = pnand %p128, %p129
      %p131 = pneg %p130
      // Predicated region
      $region9: #{tpu_custom_call.1} parent=5 // pred_check
        _
      $region10: #{tpu_custom_call.1} parent=5 // pred_check_branch
        %133 = sbr.rel (%p130) target = $region12
      $region11: #{tpu_custom_call.1} parent=5 // pred_region
        %s134 = ssub.s32 %s12, 1
        // Predicated region
        $region13: #{tpu_custom_call.1} parent=11 // pred_check
          %p135 = pneg %p71
        $region14: #{tpu_custom_call.1} parent=11 // pred_check_branch
          %137 = sbr.rel (%p135) target = $region16
        $region15: #{tpu_custom_call.1} parent=11 // pred_region
          _
        $region16: #{tpu_custom_call.1} parent=11 // pred_fallthru
          _
        // Predicated region
        $region17: #{tpu_custom_call.1} parent=11 // pred_check
          %p138 = pneg %p92
        $region18: #{tpu_custom_call.1} parent=11 // pred_check_branch
          %140 = sbr.rel (%p138) target = $region20
        $region19: #{tpu_custom_call.1} parent=11 // pred_region
          _
        $region20: #{tpu_custom_call.1} parent=11 // pred_fallthru
          _
      $region12: #{tpu_custom_call.1} parent=5 // pred_fallthru
        _
      %p141 = scmp.lt.s32.totalorder %s12, 2
      // Predicated region
      $region21: #{tpu_custom_call.1} parent=5 // pred_check
        %p142 = pneg %p141
      $region22: #{tpu_custom_call.1} parent=5 // pred_check_branch
        %144 = sbr.rel (%p142) target = $region24
      $region23: #{tpu_custom_call.1} parent=5 // pred_region
        // Predicated region
        $region25: #{tpu_custom_call.1} parent=23 // pred_check
          %p145 = pneg %p44
        $region26: #{tpu_custom_call.1} parent=23 // pred_check_branch
          %147 = sbr.rel (%p145) target = $region28
        $region27: #{tpu_custom_call.1} parent=23 // pred_region
          %p148 = scmp.lt.s32.totalorder %s19, 1
          %s149 = scalar_select %p148, %s19, 1
          %s150 = smul.addr %s149, 3
          %s151 = smul.addr %s150, 8
          %s152 = scalar_lea.vmem %s0, %s151
        $region28: #{tpu_custom_call.1} parent=23 // pred_fallthru
          _
      $region24: #{tpu_custom_call.1} parent=5 // pred_fallthru
        _
      %p153 = scmp.le.s32.totalorder 1, %s12
      %p154 = scmp.lt.s32.totalorder %s12, 3
      %p155 = pnand %p153, %p154
      %p156 = pneg %p155
      // Predicated region
      $region29: #{tpu_custom_call.1} parent=5 // pred_check
        _
      $region30: #{tpu_custom_call.1} parent=5 // pred_check_branch
        %158 = sbr.rel (%p155) target = $region32
      $region31: #{tpu_custom_call.1} parent=5 // pred_region
        %s159 = ssub.s32 %s12, 1
        %p160 = scmp.lt.s32.totalorder %s21, 1
        %s161 = scalar_select %p160, %s21, 1
        %s162 = smul.addr %s161, 3
        %s163 = smul.addr %s162, 8
        %s164 = scalar_lea.vmem %s0, %s163
        %p165 = pneg %p50
        %p166 = pneg %p47
        %p167 = pneg %p71
        %p168 = pneg %p68
        %p169 = pneg %p92
        %p170 = pneg %p89
        %p171 = pneg %p120
        %p172 = pneg %p117
        %s173 = sand.u32 %s107, 1
        %s174 = scalar_lea.sflag [#allocation3], %s173
        %s175 = sand.u32 %s107, 1
        %s176 = smul.addr %s175, 16
        %s177 = scalar_lea.vmem [#allocation2], %s176
        %p178 = scmp.lt.s32.totalorder %s21, 1
        %s179 = scalar_select %p178, %s21, 1
        %s180 = smul.addr %s179, 3
        %s181 = smul.addr %s180, 8
        %s182 = scalar_lea.vmem %s0, %s181
        %s183 = smul.u32 2, %s22
        %s184 = smul.u32 %s22, 16
        %v185 = vld [vmem:[%s2] sm:$0x1]
        %v187 = vlaneseq
        %v188 = vshrl.u32 %v187, 7
        %v189 = vsub.s32 0, %v188
        %v190 = vrot.slane %v185, %v189
        %s192 = scalar_lea.vmem %s182, %s184
        %v193 = vld [vmem:[%s192] sm:$0xff]
        %v194 = vld [vmem:[%s192 + $0x8] sm:$0xff]
        %v195 = vld [vmem:[%s1] sm:$0x1]
        %v196 = vlaneseq
        %v197 = vshrl.u32 %v196, 7
        %v198 = vsub.s32 0, %v197
        %v199 = vrot.slane %v195, %v198
        %v200 = vmul.f32 %v193, %v199
        %v201 = vmul.f32 %v194, %v199
        %v202 = vadd.f32 %v190, %v200
        %v203 = vadd.f32 %v190, %v201
        %204 = vrot.lane.b32.xlu0 %v193, 124
        %v205 = vpop.permute.xlu0 %204
        %206 = vrot.lane.b32.xlu0 %v194, 124
        %v207 = vpop.permute.xlu0 %206
        %v208 = vld [vmem:[%s1 + $0x1] sm:$0x1]
        %v209 = vlaneseq
        %v210 = vshrl.u32 %v209, 7
        %v211 = vsub.s32 0, %v210
        %v212 = vrot.slane %v208, %v211
        %v213 = vmul.f32 %v205, %v212
        %v214 = vmul.f32 %v207, %v212
        %v215 = vadd.f32 %v202, %v213
        %v216 = vadd.f32 %v203, %v214
        %217 = vrot.lane.b32.xlu0 %v193, 120
        %v218 = vpop.permute.xlu0 %217
        %219 = vrot.lane.b32.xlu0 %v194, 120
        %v220 = vpop.permute.xlu0 %219
        %v221 = vld [vmem:[%s1 + $0x2] sm:$0x1]
        %v222 = vlaneseq
        %v223 = vshrl.u32 %v222, 7
        %v224 = vsub.s32 0, %v223
        %v225 = vrot.slane %v221, %v224
        %v226 = vmul.f32 %v218, %v225
        %v227 = vmul.f32 %v220, %v225
        %v228 = vadd.f32 %v215, %v226
        %v229 = vadd.f32 %v216, %v227
        %s230 = sadd.s32 %s184, 1
        %s231 = scalar_lea.vmem %s182, %s230
        %v232 = vld [vmem:[%s231] sm:$0xff]
        %v233 = vld [vmem:[%s231 + $0x8] sm:$0xff]
        %v234 = vld [vmem:[%s1 + $0x3] sm:$0x1]
        %v235 = vlaneseq
        %v236 = vshrl.u32 %v235, 7
        %v237 = vsub.s32 0, %v236
        %v238 = vrot.slane %v234, %v237
        %v239 = vmul.f32 %v232, %v238
        %v240 = vmul.f32 %v233, %v238
        %v241 = vadd.f32 %v228, %v239
        %v242 = vadd.f32 %v229, %v240
        %243 = vrot.lane.b32.xlu0 %v232, 124
        %v244 = vpop.permute.xlu0 %243
        %245 = vrot.lane.b32.xlu0 %v233, 124
        %v246 = vpop.permute.xlu0 %245
        %v247 = vld [vmem:[%s1 + $0x4] sm:$0x1]
        %v248 = vlaneseq
        %v249 = vshrl.u32 %v248, 7
        %v250 = vsub.s32 0, %v249
        %v251 = vrot.slane %v247, %v250
        %v252 = vmul.f32 %v244, %v251
        %v253 = vmul.f32 %v246, %v251
        %v254 = vadd.f32 %v241, %v252
        %v255 = vadd.f32 %v242, %v253
        %256 = vrot.lane.b32.xlu0 %v232, 120
        %v257 = vpop.permute.xlu0 %256
        %258 = vrot.lane.b32.xlu0 %v233, 120
        %v259 = vpop.permute.xlu0 %258
        %v260 = vld [vmem:[%s1 + $0x5] sm:$0x1]
        %v261 = vlaneseq
        %v262 = vshrl.u32 %v261, 7
        %v263 = vsub.s32 0, %v262
        %v264 = vrot.slane %v260, %v263
        %v265 = vmul.f32 %v257, %v264
        %v266 = vmul.f32 %v259, %v264
        %v267 = vadd.f32 %v254, %v265
        %v268 = vadd.f32 %v255, %v266
        %s269 = sadd.s32 %s184, 2
        %s270 = scalar_lea.vmem %s182, %s269
        %v271 = vld [vmem:[%s270] sm:$0xff]
        %v272 = vld [vmem:[%s270 + $0x8] sm:$0xff]
        %v273 = vld [vmem:[%s1 + $0x6] sm:$0x1]
        %v274 = vlaneseq
        %v275 = vshrl.u32 %v274, 7
        %v276 = vsub.s32 0, %v275
        %v277 = vrot.slane %v273, %v276
        %v278 = vmul.f32 %v271, %v277
        %v279 = vmul.f32 %v272, %v277
        %v280 = vadd.f32 %v267, %v278
        %v281 = vadd.f32 %v268, %v279
        %282 = vrot.lane.b32.xlu0 %v271, 124
        %v283 = vpop.permute.xlu0 %282
        %284 = vrot.lane.b32.xlu0 %v272, 124
        %v285 = vpop.permute.xlu0 %284
        %v286 = vld [vmem:[%s1 + $0x7] sm:$0x1]
        %v287 = vlaneseq
        %v288 = vshrl.u32 %v287, 7
        %v289 = vsub.s32 0, %v288
        %v290 = vrot.slane %v286, %v289
        %v291 = vmul.f32 %v283, %v290
        %v292 = vmul.f32 %v285, %v290
        %v293 = vadd.f32 %v280, %v291
        %v294 = vadd.f32 %v281, %v292
        %295 = vrot.lane.b32.xlu0 %v271, 120
        %v296 = vpop.permute.xlu0 %295
        %297 = vrot.lane.b32.xlu0 %v272, 120
        %v298 = vpop.permute.xlu0 %297
        %v299 = vld [vmem:[%s1 + $0x8] sm:$0x1]
        %v300 = vlaneseq
        %v301 = vshrl.u32 %v300, 7
        %v302 = vsub.s32 0, %v301
        %v303 = vrot.slane %v299, %v302
        %v304 = vmul.f32 %v296, %v303
        %v305 = vmul.f32 %v298, %v303
        %v306 = vadd.f32 %v293, %v304
        %v307 = vadd.f32 %v294, %v305
        %v308 = vmax.f32 %v306, 0.0
        %v309 = vmax.f32 %v307, 0.0
        %310 = vst [vmem:[%s177] sm:$0xff] %v308
        %311 = vst [vmem:[%s177 + $0x8] sm:$0xff] %v309
        %s312 = sand.u32 %s107, 1
        %s313 = scalar_lea.sflag [#allocation3], %s312
        %s314 = sand.u32 %s107, 1
        %s315 = smul.addr %s314, 16
        %s316 = scalar_lea.vmem [#allocation2], %s315
        // Predicated region
        $region33: #{tpu_custom_call.1} parent=31 // pred_check
          %p317 = pneg %p117
        $region34: #{tpu_custom_call.1} parent=31 // pred_check_branch
          %319 = sbr.rel (%p317) target = $region36
        $region35: #{tpu_custom_call.1} parent=31 // pred_region
          %s320 = smul.u32 2, %s22
          %s322 = ssub.s32 256, 256
          %323 = vsyncadd %s313, %s322
          %s324 = smul.addr %s21, 2
          %s325 = sadd.s32 %s320, %s324
          %s326 = smul.addr %s325, 128
          %s327 = scalar_lea.hbm %s3, %s326
          %s328 = sshll.u32 %s316, 4
          %s329 = int_to_ptr.vmem [resolvable:$true] %s328
          %334 = dma.vmem_to_hbm [thread:$0]  %s329, 256, %s327, %s313, 128, 128, 8
        $region36: #{tpu_custom_call.1} parent=31 // pred_fallthru
          _
      $region32: #{tpu_custom_call.1} parent=5 // pred_fallthru
        _
      %p335 = scmp.le.s32.totalorder 2, %s12
      // Predicated region
      $region37: #{tpu_custom_call.1} parent=5 // pred_check
        %p336 = pneg %p335
      $region38: #{tpu_custom_call.1} parent=5 // pred_check_branch
        %338 = sbr.rel (%p336) target = $region40
      $region39: #{tpu_custom_call.1} parent=5 // pred_region
        %s339 = ssub.s32 %s12, 2
        // Predicated region
        $region41: #{tpu_custom_call.1} parent=39 // pred_check
          %p340 = pneg %p123
        $region42: #{tpu_custom_call.1} parent=39 // pred_check_branch
          %342 = sbr.rel (%p340) target = $region44
        $region43: #{tpu_custom_call.1} parent=39 // pred_region
          %s343 = sand.u32 %s108, 1
          %s344 = scalar_lea.sflag [#allocation3], %s343
          %s345 = sand.u32 %s108, 1
          %s346 = smul.addr %s345, 16
          %s347 = scalar_lea.vmem [#allocation2], %s346
          %348 = dma.done %s344, 256
        $region44: #{tpu_custom_call.1} parent=39 // pred_fallthru
          _
      $region40: #{tpu_custom_call.1} parent=5 // pred_fallthru
        _
    $region6: #{tpu_custom_call.1} parent=1 // loop_footer
      %s16 = sadd.s32 1, %s12
    $region7: #{tpu_custom_call.1} parent=1 // loop_footer_branch
      %11 = sbr.rel target = $region3
    $region8: #{tpu_custom_call.1} parent=1 // loop_exit
      _
    %349 = vsyncpa [#allocation3], 1
    %s350 = scalar_lea.sflag [#allocation3], 1
    %351 = vsyncpa %s350, 1

</llo_original>
